<compile_context>
chip_gen: v7x
topology: tpu7x:2x2x1
jax: 0.10.0
libtpu: 0.0.40
codegen_flags: <defaults>
</compile_context>

<pallas_src>
import jax
import jax.numpy as jnp
from jax import lax
from jax.experimental import pallas as pl
from jax.experimental.pallas import tpu as pltpu


def _round_up(n, m):
    return ((n + m - 1) // m) * m


def _budgets():
    """Per-generation block-size / VMEM-limit budgets."""
    try:
        kind = jax.devices()[0].device_kind.lower()
    except Exception:
        kind = ""
    if "v7" in kind:
        # v7x: 64 MiB VMEM per TensorCore, 2 TCs -> small blocks, keep >=2 grid steps.
        return {"block_bytes": 4 << 20, "vmem_limit": 48 << 20, "two_step": True}
    if "v5" in kind or "v6" in kind:
        # v5e / v6e: 128 MiB VMEM -> bigger blocks amortize per-grid-step overhead.
        return {"block_bytes": 10 << 20, "vmem_limit": 96 << 20, "two_step": False}
    return {"block_bytes": 6 << 20, "vmem_limit": 64 << 20, "two_step": False}


# --------------------------------------------------------------------------- kernels

def _make_folded_kernel(c, hwp, true_hw):
    """C < 8: x is (TB, C*HWp); every channel is a static, 128-aligned lane segment."""
    inv_hw = 1.0 / float(true_hw)

    def kernel(x_ref, cw_ref, cb_ref, w1t_ref, b1_ref, w2_ref, b2_ref, o_ref):
        xf = x_ref[...].astype(jnp.float32)                          # (TB, C*HWp)
        segs = [xf[:, ci * hwp:(ci + 1) * hwp] for ci in range(c)]   # (TB, HWp) each

        # Global average pool: padded lanes are zero, divide by the TRUE H*W.
        gaps = [jnp.sum(segs[ci], axis=-1, keepdims=True) * inv_hw for ci in range(c)]

        # Squeeze-excite MLP on the VPU (C, HID are tiny).
        h = gaps[0] * w1t_ref[0:1, :]
        for ci in range(1, c):
            h = h + gaps[ci] * w1t_ref[ci:ci + 1, :]
        h = jnp.maximum(h + b1_ref[...], 0.0)                        # (TB, HID)

        atts = []
        for o in range(c):
            logit = jnp.sum(h * w2_ref[o:o + 1, :], axis=-1, keepdims=True) + b2_ref[o]
            atts.append(jax.nn.sigmoid(logit))                       # (TB, 1)

        # 1x1 conv + gate + residual; each output segment is one fused FMA chain
        # (conv weights are SMEM scalars) stored exactly once.
        for o in range(c):
            acc = segs[0] * cw_ref[o, 0]
            for ci in range(1, c):
                acc = acc + segs[ci] * cw_ref[o, ci]
            out_seg = segs[o] + atts[o] * (acc + cb_ref[o])
            o_ref[:, o * hwp:(o + 1) * hwp] = out_seg.astype(o_ref.dtype)

    return kernel


def _make_3d_kernel(c, true_hw, use_mxu):
    """C >= 8, full-spatial block (TB, C, HWp)."""
    inv_hw = 1.0 / float(true_hw)

    def se_attention(xf, w1t_ref, b1_ref, w2t_ref, b2_ref):
        gap = jnp.sum(xf, axis=-1) * inv_hw                          # (TB, C)
        h = jnp.maximum(
            jnp.dot(gap, w1t_ref[...], preferred_element_type=jnp.float32,
                    precision=lax.Precision.HIGHEST) + b1_ref[...], 0.0)
        return jax.nn.sigmoid(
            jnp.dot(h, w2t_ref[...], preferred_element_type=jnp.float32,
                    precision=lax.Precision.HIGHEST) + b2_ref[...])  # (TB, C)

    if use_mxu:
        def kernel(x_ref, cw_ref, cb_ref, w1t_ref, b1_ref, w2t_ref, b2_ref, o_ref):
            x = x_ref[...]
            xf = x.astype(jnp.float32)
            att = se_attention(xf, w1t_ref, b1_ref, w2t_ref, b2_ref)
            tb = x.shape[0]
            # bf16 operands, f32 accumulation; batched matmul avoids in-kernel transposes.
            cwb = jnp.broadcast_to(cw_ref[...].astype(jnp.bfloat16)[None], (tb, c, c))
            z = jnp.einsum('boc,bcs->bos', cwb, x.astype(jnp.bfloat16),
                           preferred_element_type=jnp.float32)
            z = z + cb_ref[...][None, :, :]
            o_ref[...] = (xf + z * att[:, :, None]).astype(o_ref.dtype)
    else:
        def kernel(x_ref, cw_ref, cb_ref, w1t_ref, b1_ref, w2t_ref, b2_ref, o_ref):
            xf = x_ref[...].astype(jnp.float32)                      # (TB, C, HWp)
            att = se_attention(xf, w1t_ref, b1_ref, w2t_ref, b2_ref)
            rows = [xf[:, ci, :] for ci in range(c)]
            for o in range(c):
                acc = rows[0] * cw_ref[o, 0]
                for ci in range(1, c):
                    acc = acc + rows[ci] * cw_ref[o, ci]
                out_row = rows[o] + att[:, o:o + 1] * (acc + cb_ref[o])
                o_ref[:, o, :] = out_row.astype(o_ref.dtype)

    return kernel


def _make_gap_att_kernel(c, true_hw, thw, need_mask):
    """Spatially tiled pass 1: accumulate GAP over HW tiles, emit SE attention at the end."""
    inv_hw = 1.0 / float(true_hw)

    def kernel(x_ref, w1t_ref, b1_ref, w2t_ref, b2_ref, att_ref, gap_acc):
        j = pl.program_id(1)

        @pl.when(j == 0)
        def _():
            gap_acc[...] = jnp.zeros_like(gap_acc)

        xf = x_ref[...].astype(jnp.float32)                          # (TB, C, THW)
        if need_mask:
            lane = lax.broadcasted_iota(jnp.int32, xf.shape, 2) + j * thw
            xf = jnp.where(lane < true_hw, xf, 0.0)
        gap_acc[...] += jnp.sum(xf, axis=-1)

        @pl.when(j == pl.num_programs(1) - 1)
        def _():
            gap = gap_acc[...] * inv_hw
            h = jnp.maximum(
                jnp.dot(gap, w1t_ref[...], preferred_element_type=jnp.float32,
                        precision=lax.Precision.HIGHEST) + b1_ref[...], 0.0)
            att_ref[...] = jax.nn.sigmoid(
                jnp.dot(h, w2t_ref[...], preferred_element_type=jnp.float32,
                        precision=lax.Precision.HIGHEST) + b2_ref[...])

    return kernel


def _make_conv_gate_kernel(c, use_mxu):
    """Spatially tiled pass 2: 1x1 conv + gate + residual on one (TB, C, THW) tile."""
    if use_mxu:
        def kernel(x_ref, att_ref, cw_ref, cb_ref, o_ref):
            x = x_ref[...]
            xf = x.astype(jnp.float32)
            att = att_ref[...]
            tb = x.shape[0]
            cwb = jnp.broadcast_to(cw_ref[...].astype(jnp.bfloat16)[None], (tb, c, c))
            z = jnp.einsum('boc,bcs->bos', cwb, x.astype(jnp.bfloat16),
                           preferred_element_type=jnp.float32)
            z = z + cb_ref[...][None, :, :]
            o_ref[...] = (xf + z * att[:, :, None]).astype(o_ref.dtype)
    else:
        def kernel(x_ref, att_ref, cw_ref, cb_ref, o_ref):
            xf = x_ref[...].astype(jnp.float32)
            att = att_ref[...]
            rows = [xf[:, ci, :] for ci in range(c)]
            for o in range(c):
                acc = rows[0] * cw_ref[o, 0]
                for ci in range(1, c):
                    acc = acc + rows[ci] * cw_ref[o, ci]
                out_row = rows[o] + att[:, o:o + 1] * (acc + cb_ref[o])
                o_ref[:, o, :] = out_row.astype(o_ref.dtype)

    return kernel


# --------------------------------------------------------------------------- wrapper

def cs_attention(x, conv_w, conv_b, w1, b1, w2, b2, *,
                 block_bytes_target=None, vmem_limit_bytes=None,
                 mxu_min_c=32, force_hw_tile=None):
    """CSAttention forward.  x: (B, C, H, W); weights in PyTorch conventions:
       conv_w (C,C), conv_b (C,), w1 (HID,C), b1 (HID,), w2 (C,HID), b2 (C,)."""
    f32 = jnp.float32
    conv_w = jnp.asarray(conv_w, f32)
    conv_b = jnp.asarray(conv_b, f32)
    w1 = jnp.asarray(w1, f32)
    b1 = jnp.asarray(b1, f32)
    w2 = jnp.asarray(w2, f32)
    b2 = jnp.asarray(b2, f32)

    b, c, h, w = x.shape
    hw = h * w
    hid = w1.shape[0]
    hwp = _round_up(hw, 128)                 # lane-dense spatial extent
    itemsize = x.dtype.itemsize

    folded = c < 8
    use_mxu = c >= mxu_min_c
    c_sub = _round_up(c, 8)                  # sublane-padded C for 3-D blocks

    cfg = _budgets()
    block_bytes = block_bytes_target if block_bytes_target is not None else cfg["block_bytes"]
    vmem_limit = vmem_limit_bytes if vmem_limit_bytes is not None else cfg["vmem_limit"]
    two_step = cfg["two_step"]

    # Kernel-friendly weight layouts, pre-transposed ONCE in the wrapper.
    w1t = w1.T                               # (C, HID)
    w2t = w2.T                               # (HID, C)
    b1r = b1.reshape(1, hid)
    b2r = b2.reshape(1, c)
    cb_col = conv_b.reshape(c, 1)

    weight_bytes = 4 * (c * c + c + 2 * c * hid + hid + c)
    budget = int(0.8 * vmem_limit) - weight_bytes

    # Real VMEM need per batch row of a full-spatial block: double-buffered in + out
    # streams plus ~2 f32 temporaries inside the kernel body.
    c_blk = c if folded else c_sub
    row_in = c_blk * hwp * itemsize
    per_row = 4 * row_in + 2 * c_blk * hwp * 4

    spatial = (force_hw_tile is not None) or (per_row > budget)

    smem = pl.BlockSpec(memory_space=pltpu.MemorySpace.SMEM)

    if not spatial:
        # -------------------------------------------- fused single-pass kernel
        tb = max(1, min(b, budget // per_row, max(1, block_bytes // row_in)))
        if two_step and b > 1:
            tb = min(tb, pl.cdiv(b, 2))      # keep >=2 grid steps for v7x's 2 TCs
        if tb >= 8:
            tb = (tb // 8) * 8
        nb = pl.cdiv(b, tb)

        x_flat = x.reshape(b, c, hw)
        if hwp != hw:                        # only pad when H*W is not lane-aligned
            x_flat = jnp.pad(x_flat, ((0, 0), (0, 0), (0, hwp - hw)))

        if folded:
            x_in = x_flat.reshape(b, c * hwp)
            kernel = _make_folded_kernel(c, hwp, hw)
            in_specs = [
                pl.BlockSpec((tb, c * hwp), lambda i: (i, 0)),       # x (lane-folded)
                smem,                                                # conv weight (C,C)
                smem,                                                # conv bias   (C,)
                pl.BlockSpec((c, hid), lambda i: (0, 0)),            # w1^T
                pl.BlockSpec((1, hid), lambda i: (0, 0)),            # b1
                pl.BlockSpec((c, hid), lambda i: (0, 0)),            # w2
                smem,                                                # b2 (C,)
            ]
            out_spec = pl.BlockSpec((tb, c * hwp), lambda i: (i, 0))
            out_shape = jax.ShapeDtypeStruct((b, c * hwp), x.dtype)
            args = (x_in, conv_w, conv_b, w1t, b1r, w2, b2)
        else:
            kernel = _make_3d_kernel(c, hw, use_mxu)
            if use_mxu:
                cw_spec = pl.BlockSpec((c, c), lambda i: (0, 0))
                cb_spec = pl.BlockSpec((c, 1), lambda i: (0, 0))
                cw_arg, cb_arg = conv_w, cb_col
            else:
                cw_spec, cb_spec = smem, smem
                cw_arg, cb_arg = conv_w, conv_b
            in_specs = [
                pl.BlockSpec((tb, c, hwp), lambda i: (i, 0, 0)),     # x
                cw_spec, cb_spec,
                pl.BlockSpec((c, hid), lambda i: (0, 0)),            # w1^T
                pl.BlockSpec((1, hid), lambda i: (0, 0)),            # b1
                pl.BlockSpec((hid, c), lambda i: (0, 0)),            # w2^T
                pl.BlockSpec((1, c), lambda i: (0, 0)),              # b2
            ]
            out_spec = pl.BlockSpec((tb, c, hwp), lambda i: (i, 0, 0))
            out_shape = jax.ShapeDtypeStruct((b, c, hwp), x.dtype)
            args = (x_flat, cw_arg, cb_arg, w1t, b1r, w2t, b2r)

        cost = pl.CostEstimate(
            flops=int(2 * b * c * c * hw + 4 * b * c * hid + 2 * b * c * hw),
            transcendentals=int(b * c),
            bytes_accessed=int(2 * b * c_blk * hwp * itemsize + weight_bytes),
        )

        out = pl.pallas_call(
            kernel,
            out_shape=out_shape,
            grid_spec=pltpu.PrefetchScalarGridSpec(
                num_scalar_prefetch=0,
                grid=(nb,),
                in_specs=in_specs,
                out_specs=out_spec,
            ),
            compiler_params=pltpu.CompilerParams(
                dimension_semantics=("parallel",),
                vmem_limit_bytes=vmem_limit,
            ),
            cost_estimate=cost,
        )(*args)

        if folded:
            out = out.reshape(b, c, hwp)
        if hwp != hw:
            out = out[:, :, :hw]
        return out.reshape(b, c, h, w)

    # ------------------------------------------ spatially tiled two-pass fallback
    x_flat = x.reshape(b, c, hw)             # no HBM-copying pad pass on big tensors

    if force_hw_tile is not None:
        thw = int(force_hw_tile)
    else:
        per_lane = c_sub * (4 * itemsize + 8)    # VMEM bytes per spatial lane per row
        lanes = min(block_bytes // (c_sub * itemsize), max(128, budget // per_lane))
        thw = max(128, (lanes // 128) * 128)
    if thw >= hw:
        thw = hw
    n_hw = pl.cdiv(hw, thw)
    need_mask = (hw % thw) != 0

    per_row_tile = c_sub * thw * (4 * itemsize + 8)
    tb = max(1, min(b, max(1, budget // per_row_tile),
                    max(1, block_bytes // (c_sub * thw * itemsize))))
    if two_step and b > 1:
        tb = min(tb, pl.cdiv(b, 2))
    nb = pl.cdiv(b, tb)

    # Pass 1: GAP accumulated over HW tiles; SE-MLP emitted on the last tile.
    att = pl.pallas_call(
        _make_gap_att_kernel(c, hw, thw, need_mask),
        out_shape=jax.ShapeDtypeStruct((b, c), jnp.float32),
        grid_spec=pltpu.PrefetchScalarGridSpec(
            num_scalar_prefetch=0,
            grid=(nb, n_hw),
            in_specs=[
                pl.BlockSpec((tb, c, thw), lambda i, j: (i, 0, j)),
                pl.BlockSpec((c, hid), lambda i, j: (0, 0)),
                pl.BlockSpec((1, hid), lambda i, j: (0, 0)),
                pl.BlockSpec((hid, c), lambda i, j: (0, 0)),
                pl.BlockSpec((1, c), lambda i, j: (0, 0)),
            ],
            out_specs=pl.BlockSpec((tb, c), lambda i, j: (i, 0)),
            scratch_shapes=[pltpu.VMEM((tb, c), jnp.float32)],
        ),
        compiler_params=pltpu.CompilerParams(
            dimension_semantics=("parallel", "arbitrary"),
            vmem_limit_bytes=vmem_limit,
        ),
    )(x_flat, w1t, b1r, w2t, b2r)

    # Pass 2: 1x1 conv + gate + residual streamed over spatial tiles.
    if use_mxu:
        cw_spec = pl.BlockSpec((c, c), lambda i, j: (0, 0))
        cb_spec = pl.BlockSpec((c, 1), lambda i, j: (0, 0))
        cw_arg, cb_arg = conv_w, cb_col
    else:
        cw_spec, cb_spec = smem, smem
        cw_arg, cb_arg = conv_w, conv_b

    out = pl.pallas_call(
        _make_conv_gate_kernel(c, use_mxu),
        out_shape=jax.ShapeDtypeStruct((b, c, hw), x.dtype),
        grid_spec=pltpu.PrefetchScalarGridSpec(
            num_scalar_prefetch=0,
            grid=(nb, n_hw),
            in_specs=[
                pl.BlockSpec((tb, c, thw), lambda i, j: (i, 0, j)),
                pl.BlockSpec((tb, c), lambda i, j: (i, 0)),
                cw_spec, cb_spec,
            ],
            out_specs=pl.BlockSpec((tb, c, thw), lambda i, j: (i, 0, j)),
        ),
        compiler_params=pltpu.CompilerParams(
            dimension_semantics=("parallel", "parallel"),
            vmem_limit_bytes=vmem_limit,
        ),
    )(x_flat, att, cw_arg, cb_arg)

    return out.reshape(b, c, h, w)


# --------------------------------------------------------------------------- demo / checks

def _reference(x, conv_w, conv_b, w1, b1, w2, b2):
    gap = jnp.mean(x, axis=(2, 3))
    y = jax.nn.relu(gap @ w1.T + b1)
    y = jax.nn.sigmoid(y @ w2.T + b2)
    z = jnp.einsum('oc,bchw->bohw', conv_w, x) + conv_b[None, :, None, None]
    return x + z * y[:, :, None, None]


def _make_inputs(key, b, c, h, w, hid):
    ks = jax.random.split(key, 7)
    x = jax.random.normal(ks[0], (b, c, h, w), jnp.float32)
    conv_w = jax.random.normal(ks[1], (c, c), jnp.float32) * 0.1
    conv_b = jax.random.normal(ks[2], (c,), jnp.float32) * 0.1
    w1 = jax.random.normal(ks[3], (hid, c), jnp.float32) * 0.1
    b1 = jax.random.normal(ks[4], (hid,), jnp.float32) * 0.1
    w2 = jax.random.normal(ks[5], (c, hid), jnp.float32) * 0.1
    b2 = jax.random.normal(ks[6], (c,), jnp.float32) * 0.1
    return x, conv_w, conv_b, w1, b1, w2, b2


if __name__ == "__main__":
    key = jax.random.PRNGKey(0)
    k1, k2, k3, k4 = jax.random.split(key, 4)

    # 1) Main small-C case (lane-folded VPU path): B=2, C=4, 16x16, HID=32.
    args = _make_inputs(k1, 2, 4, 16, 16, 32)
    out = cs_attention(*args)
    jax.block_until_ready(out)
    ref = _reference(*args)
    assert out.shape == ref.shape
    assert jnp.allclose(out, ref, atol=1e-3, rtol=1e-3), "folded VPU path mismatch"

    # 2) Mid-C fused VPU path (8 <= C < 32): B=2, C=16, 16x16, HID=8.
    args = _make_inputs(k2, 2, 16, 16, 16, 8)
    out = cs_attention(*args)
    jax.block_until_ready(out)
    ref = _reference(*args)
    assert jnp.allclose(out, ref, atol=1e-3, rtol=1e-3), "3D VPU path mismatch"

    # 3) Large-C MXU path (bf16 matmul operands, f32 accumulation): B=4, C=64, 16x16.
    args = _make_inputs(k3, 4, 64, 16, 16, 32)
    out = cs_attention(*args)
    jax.block_until_ready(out)
    ref = _reference(*args)
    assert jnp.allclose(out, ref, atol=3e-2, rtol=3e-2), "MXU path mismatch"

    # 4) Spatially tiled two-pass fallback, forced with a small HW tile.
    args = _make_inputs(k4, 2, 4, 16, 16, 32)
    out = cs_attention(*args, force_hw_tile=128)
    jax.block_until_ready(out)
    ref = _reference(*args)
    assert jnp.allclose(out, ref, atol=1e-3, rtol=1e-3), "spatially-tiled path mismatch"

    print("KERNEL_OK")
</pallas_src>

<mosaic_0001>
module attributes {stable_mosaic.version = 11 : i64} {
  func.func @kernel(%arg0: i32, %arg1: memref<2x1024xf32, #tpu.memory_space<vmem>>, %arg2: memref<4x4xf32, #tpu.memory_space<smem>>, %arg3: memref<4xf32, #tpu.memory_space<smem>>, %arg4: memref<4x32xf32, #tpu.memory_space<vmem>>, %arg5: memref<1x32xf32, #tpu.memory_space<vmem>>, %arg6: memref<4x32xf32, #tpu.memory_space<vmem>>, %arg7: memref<4xf32, #tpu.memory_space<smem>>, %arg8: memref<2x1024xf32, #tpu.memory_space<vmem>>) attributes {dimension_semantics = [#tpu.dimension_semantics<parallel>], iteration_bounds = array<i64: 1>, scalar_prefetch = 0 : i64, scratch_operands = 0 : i64, tpu.core_type = #tpu.core_type<tc>, window_params = [{transform_indices = @transform_0, window_bounds = array<i64: 2, 1024>}, {transform_indices = @transform_1, window_bounds = array<i64: 4, 4>}, {transform_indices = @transform_2, window_bounds = array<i64: 4>}, {pipeline_mode = #tpu.pipeline_mode<synchronous>, transform_indices = @transform_3, window_bounds = array<i64: 4, 32>}, {pipeline_mode = #tpu.pipeline_mode<synchronous>, transform_indices = @transform_4, window_bounds = array<i64: 1, 32>}, {pipeline_mode = #tpu.pipeline_mode<synchronous>, transform_indices = @transform_5, window_bounds = array<i64: 4, 32>}, {transform_indices = @transform_6, window_bounds = array<i64: 4>}, {transform_indices = @transform_7, window_bounds = array<i64: 2, 1024>}]} {
    %c0 = arith.constant 0 : index
    %c0_0 = arith.constant 0 : index
    %0 = vector.load %arg1[%c0, %c0_0] : memref<2x1024xf32, #tpu.memory_space<vmem>>, vector<2x1024xf32>
    %1 = vector.extract_strided_slice %0 {offsets = [0, 0], sizes = [2, 256], strides = [1, 1]} : vector<2x1024xf32> to vector<2x256xf32>
    %2 = vector.extract_strided_slice %0 {offsets = [0, 256], sizes = [2, 256], strides = [1, 1]} : vector<2x1024xf32> to vector<2x256xf32>
    %3 = vector.extract_strided_slice %0 {offsets = [0, 512], sizes = [2, 256], strides = [1, 1]} : vector<2x1024xf32> to vector<2x256xf32>
    %4 = vector.extract_strided_slice %0 {offsets = [0, 768], sizes = [2, 256], strides = [1, 1]} : vector<2x1024xf32> to vector<2x256xf32>
    %cst = arith.constant dense<0.000000e+00> : vector<2xf32>
    %5 = vector.multi_reduction <add>, %1, %cst [1] : vector<2x256xf32> to vector<2xf32>
    %6 = vector.shape_cast %5 : vector<2xf32> to vector<2x1xf32>
    %cst_1 = arith.constant 3.906250e-03 : f32
    %7 = vector.broadcast %cst_1 : f32 to vector<2x1xf32>
    %8 = arith.mulf %6, %7 : vector<2x1xf32>
    %cst_2 = arith.constant dense<0.000000e+00> : vector<2xf32>
    %9 = vector.multi_reduction <add>, %2, %cst_2 [1] : vector<2x256xf32> to vector<2xf32>
    %10 = vector.shape_cast %9 : vector<2xf32> to vector<2x1xf32>
    %cst_3 = arith.constant 3.906250e-03 : f32
    %11 = vector.broadcast %cst_3 : f32 to vector<2x1xf32>
    %12 = arith.mulf %10, %11 : vector<2x1xf32>
    %cst_4 = arith.constant dense<0.000000e+00> : vector<2xf32>
    %13 = vector.multi_reduction <add>, %3, %cst_4 [1] : vector<2x256xf32> to vector<2xf32>
    %14 = vector.shape_cast %13 : vector<2xf32> to vector<2x1xf32>
    %cst_5 = arith.constant 3.906250e-03 : f32
    %15 = vector.broadcast %cst_5 : f32 to vector<2x1xf32>
    %16 = arith.mulf %14, %15 : vector<2x1xf32>
    %cst_6 = arith.constant dense<0.000000e+00> : vector<2xf32>
    %17 = vector.multi_reduction <add>, %4, %cst_6 [1] : vector<2x256xf32> to vector<2xf32>
    %18 = vector.shape_cast %17 : vector<2xf32> to vector<2x1xf32>
    %cst_7 = arith.constant 3.906250e-03 : f32
    %19 = vector.broadcast %cst_7 : f32 to vector<2x1xf32>
    %20 = arith.mulf %18, %19 : vector<2x1xf32>
    %c0_8 = arith.constant 0 : index
    %c0_9 = arith.constant 0 : index
    %21 = vector.load %arg4[%c0_8, %c0_9] : memref<4x32xf32, #tpu.memory_space<vmem>>, vector<1x32xf32>
    %22 = vector.broadcast %8 : vector<2x1xf32> to vector<2x32xf32>
    %23 = vector.broadcast %21 : vector<1x32xf32> to vector<2x32xf32>
    %24 = arith.mulf %22, %23 : vector<2x32xf32>
    %c1 = arith.constant 1 : index
    %c0_10 = arith.constant 0 : index
    %25 = vector.load %arg4[%c1, %c0_10] : memref<4x32xf32, #tpu.memory_space<vmem>>, vector<1x32xf32>
    %26 = vector.broadcast %12 : vector<2x1xf32> to vector<2x32xf32>
    %27 = vector.broadcast %25 : vector<1x32xf32> to vector<2x32xf32>
    %28 = arith.mulf %26, %27 : vector<2x32xf32>
    %29 = arith.addf %24, %28 : vector<2x32xf32>
    %c2 = arith.constant 2 : index
    %c0_11 = arith.constant 0 : index
    %30 = vector.load %arg4[%c2, %c0_11] : memref<4x32xf32, #tpu.memory_space<vmem>>, vector<1x32xf32>
    %31 = vector.broadcast %16 : vector<2x1xf32> to vector<2x32xf32>
    %32 = vector.broadcast %30 : vector<1x32xf32> to vector<2x32xf32>
    %33 = arith.mulf %31, %32 : vector<2x32xf32>
    %34 = arith.addf %29, %33 : vector<2x32xf32>
    %c3 = arith.constant 3 : index
    %c0_12 = arith.constant 0 : index
    %35 = vector.load %arg4[%c3, %c0_12] : memref<4x32xf32, #tpu.memory_space<vmem>>, vector<1x32xf32>
    %36 = vector.broadcast %20 : vector<2x1xf32> to vector<2x32xf32>
    %37 = vector.broadcast %35 : vector<1x32xf32> to vector<2x32xf32>
    %38 = arith.mulf %36, %37 : vector<2x32xf32>
    %39 = arith.addf %34, %38 : vector<2x32xf32>
    %c0_13 = arith.constant 0 : index
    %c0_14 = arith.constant 0 : index
    %40 = vector.load %arg5[%c0_13, %c0_14] : memref<1x32xf32, #tpu.memory_space<vmem>>, vector<1x32xf32>
    %41 = vector.broadcast %40 : vector<1x32xf32> to vector<2x32xf32>
    %42 = arith.addf %39, %41 : vector<2x32xf32>
    %cst_15 = arith.constant 0.000000e+00 : f32
    %43 = vector.broadcast %cst_15 : f32 to vector<2x32xf32>
    %44 = arith.maximumf %42, %43 : vector<2x32xf32>
    %c0_16 = arith.constant 0 : index
    %c0_17 = arith.constant 0 : index
    %45 = vector.load %arg6[%c0_16, %c0_17] : memref<4x32xf32, #tpu.memory_space<vmem>>, vector<1x32xf32>
    %46 = vector.broadcast %45 : vector<1x32xf32> to vector<2x32xf32>
    %47 = arith.mulf %44, %46 : vector<2x32xf32>
    %cst_18 = arith.constant dense<0.000000e+00> : vector<2xf32>
    %48 = vector.multi_reduction <add>, %47, %cst_18 [1] : vector<2x32xf32> to vector<2xf32>
    %49 = vector.shape_cast %48 : vector<2xf32> to vector<2x1xf32>
    %c0_19 = arith.constant 0 : index
    %50 = memref.load %arg7[%c0_19] : memref<4xf32, #tpu.memory_space<smem>>
    %51 = vector.broadcast %50 : f32 to vector<2x1xf32>
    %52 = arith.addf %49, %51 : vector<2x1xf32>
    %53 = arith.negf %52 : vector<2x1xf32>
    %54 = math.exp %53 : vector<2x1xf32>
    %cst_20 = arith.constant 1.000000e+00 : f32
    %55 = vector.broadcast %cst_20 : f32 to vector<2x1xf32>
    %56 = arith.addf %55, %54 : vector<2x1xf32>
    %57 = arith.divf %55, %56 : vector<2x1xf32>
    %c1_21 = arith.constant 1 : index
    %c0_22 = arith.constant 0 : index
    %58 = vector.load %arg6[%c1_21, %c0_22] : memref<4x32xf32, #tpu.memory_space<vmem>>, vector<1x32xf32>
    %59 = vector.broadcast %58 : vector<1x32xf32> to vector<2x32xf32>
    %60 = arith.mulf %44, %59 : vector<2x32xf32>
    %cst_23 = arith.constant dense<0.000000e+00> : vector<2xf32>
    %61 = vector.multi_reduction <add>, %60, %cst_23 [1] : vector<2x32xf32> to vector<2xf32>
    %62 = vector.shape_cast %61 : vector<2xf32> to vector<2x1xf32>
    %c1_24 = arith.constant 1 : index
    %63 = memref.load %arg7[%c1_24] : memref<4xf32, #tpu.memory_space<smem>>
    %64 = vector.broadcast %63 : f32 to vector<2x1xf32>
    %65 = arith.addf %62, %64 : vector<2x1xf32>
    %66 = arith.negf %65 : vector<2x1xf32>
    %67 = math.exp %66 : vector<2x1xf32>
    %cst_25 = arith.constant 1.000000e+00 : f32
    %68 = vector.broadcast %cst_25 : f32 to vector<2x1xf32>
    %69 = arith.addf %68, %67 : vector<2x1xf32>
    %70 = arith.divf %68, %69 : vector<2x1xf32>
    %c2_26 = arith.constant 2 : index
    %c0_27 = arith.constant 0 : index
    %71 = vector.load %arg6[%c2_26, %c0_27] : memref<4x32xf32, #tpu.memory_space<vmem>>, vector<1x32xf32>
    %72 = vector.broadcast %71 : vector<1x32xf32> to vector<2x32xf32>
    %73 = arith.mulf %44, %72 : vector<2x32xf32>
    %cst_28 = arith.constant dense<0.000000e+00> : vector<2xf32>
    %74 = vector.multi_reduction <add>, %73, %cst_28 [1] : vector<2x32xf32> to vector<2xf32>
    %75 = vector.shape_cast %74 : vector<2xf32> to vector<2x1xf32>
    %c2_29 = arith.constant 2 : index
    %76 = memref.load %arg7[%c2_29] : memref<4xf32, #tpu.memory_space<smem>>
    %77 = vector.broadcast %76 : f32 to vector<2x1xf32>
    %78 = arith.addf %75, %77 : vector<2x1xf32>
    %79 = arith.negf %78 : vector<2x1xf32>
    %80 = math.exp %79 : vector<2x1xf32>
    %cst_30 = arith.constant 1.000000e+00 : f32
    %81 = vector.broadcast %cst_30 : f32 to vector<2x1xf32>
    %82 = arith.addf %81, %80 : vector<2x1xf32>
    %83 = arith.divf %81, %82 : vector<2x1xf32>
    %c3_31 = arith.constant 3 : index
    %c0_32 = arith.constant 0 : index
    %84 = vector.load %arg6[%c3_31, %c0_32] : memref<4x32xf32, #tpu.memory_space<vmem>>, vector<1x32xf32>
    %85 = vector.broadcast %84 : vector<1x32xf32> to vector<2x32xf32>
    %86 = arith.mulf %44, %85 : vector<2x32xf32>
    %cst_33 = arith.constant dense<0.000000e+00> : vector<2xf32>
    %87 = vector.multi_reduction <add>, %86, %cst_33 [1] : vector<2x32xf32> to vector<2xf32>
    %88 = vector.shape_cast %87 : vector<2xf32> to vector<2x1xf32>
    %c3_34 = arith.constant 3 : index
    %89 = memref.load %arg7[%c3_34] : memref<4xf32, #tpu.memory_space<smem>>
    %90 = vector.broadcast %89 : f32 to vector<2x1xf32>
    %91 = arith.addf %88, %90 : vector<2x1xf32>
    %92 = arith.negf %91 : vector<2x1xf32>
    %93 = math.exp %92 : vector<2x1xf32>
    %cst_35 = arith.constant 1.000000e+00 : f32
    %94 = vector.broadcast %cst_35 : f32 to vector<2x1xf32>
    %95 = arith.addf %94, %93 : vector<2x1xf32>
    %96 = arith.divf %94, %95 : vector<2x1xf32>
    %c0_36 = arith.constant 0 : index
    %c0_37 = arith.constant 0 : index
    %97 = memref.load %arg2[%c0_36, %c0_37] : memref<4x4xf32, #tpu.memory_space<smem>>
    %98 = vector.broadcast %97 : f32 to vector<2x256xf32>
    %99 = arith.mulf %1, %98 : vector<2x256xf32>
    %c0_38 = arith.constant 0 : index
    %c1_39 = arith.constant 1 : index
    %100 = memref.load %arg2[%c0_38, %c1_39] : memref<4x4xf32, #tpu.memory_space<smem>>
    %101 = vector.broadcast %100 : f32 to vector<2x256xf32>
    %102 = arith.mulf %2, %101 : vector<2x256xf32>
    %103 = arith.addf %99, %102 : vector<2x256xf32>
    %c0_40 = arith.constant 0 : index
    %c2_41 = arith.constant 2 : index
    %104 = memref.load %arg2[%c0_40, %c2_41] : memref<4x4xf32, #tpu.memory_space<smem>>
    %105 = vector.broadcast %104 : f32 to vector<2x256xf32>
    %106 = arith.mulf %3, %105 : vector<2x256xf32>
    %107 = arith.addf %103, %106 : vector<2x256xf32>
    %c0_42 = arith.constant 0 : index
    %c3_43 = arith.constant 3 : index
    %108 = memref.load %arg2[%c0_42, %c3_43] : memref<4x4xf32, #tpu.memory_space<smem>>
    %109 = vector.broadcast %108 : f32 to vector<2x256xf32>
    %110 = arith.mulf %4, %109 : vector<2x256xf32>
    %111 = arith.addf %107, %110 : vector<2x256xf32>
    %c0_44 = arith.constant 0 : index
    %112 = memref.load %arg3[%c0_44] : memref<4xf32, #tpu.memory_space<smem>>
    %113 = vector.broadcast %112 : f32 to vector<2x256xf32>
    %114 = arith.addf %111, %113 : vector<2x256xf32>
    %115 = vector.broadcast %57 : vector<2x1xf32> to vector<2x256xf32>
    %116 = arith.mulf %115, %114 : vector<2x256xf32>
    %117 = arith.addf %1, %116 : vector<2x256xf32>
    %c0_45 = arith.constant 0 : index
    %c0_46 = arith.constant 0 : index
    %118 = vector.load %arg8[%c0_45, %c0_46] : memref<2x1024xf32, #tpu.memory_space<vmem>>, vector<2x256xf32>
    tpu.vector_store %arg8[%c0_45, %c0_46], %117 {strides = array<i32>} : memref<2x1024xf32, #tpu.memory_space<vmem>>, vector<2x256xf32>,
    %c1_47 = arith.constant 1 : index
    %c0_48 = arith.constant 0 : index
    %119 = memref.load %arg2[%c1_47, %c0_48] : memref<4x4xf32, #tpu.memory_space<smem>>
    %120 = vector.broadcast %119 : f32 to vector<2x256xf32>
    %121 = arith.mulf %1, %120 : vector<2x256xf32>
    %c1_49 = arith.constant 1 : index
    %c1_50 = arith.constant 1 : index
    %122 = memref.load %arg2[%c1_49, %c1_50] : memref<4x4xf32, #tpu.memory_space<smem>>
    %123 = vector.broadcast %122 : f32 to vector<2x256xf32>
    %124 = arith.mulf %2, %123 : vector<2x256xf32>
    %125 = arith.addf %121, %124 : vector<2x256xf32>
    %c1_51 = arith.constant 1 : index
    %c2_52 = arith.constant 2 : index
    %126 = memref.load %arg2[%c1_51, %c2_52] : memref<4x4xf32, #tpu.memory_space<smem>>
    %127 = vector.broadcast %126 : f32 to vector<2x256xf32>
    %128 = arith.mulf %3, %127 : vector<2x256xf32>
    %129 = arith.addf %125, %128 : vector<2x256xf32>
    %c1_53 = arith.constant 1 : index
    %c3_54 = arith.constant 3 : index
    %130 = memref.load %arg2[%c1_53, %c3_54] : memref<4x4xf32, #tpu.memory_space<smem>>
    %131 = vector.broadcast %130 : f32 to vector<2x256xf32>
    %132 = arith.mulf %4, %131 : vector<2x256xf32>
    %133 = arith.addf %129, %132 : vector<2x256xf32>
    %c1_55 = arith.constant 1 : index
    %134 = memref.load %arg3[%c1_55] : memref<4xf32, #tpu.memory_space<smem>>
    %135 = vector.broadcast %134 : f32 to vector<2x256xf32>
    %136 = arith.addf %133, %135 : vector<2x256xf32>
    %137 = vector.broadcast %70 : vector<2x1xf32> to vector<2x256xf32>
    %138 = arith.mulf %137, %136 : vector<2x256xf32>
    %139 = arith.addf %2, %138 : vector<2x256xf32>
    %c0_56 = arith.constant 0 : index
    %c256 = arith.constant 256 : index
    %140 = vector.load %arg8[%c0_56, %c256] : memref<2x1024xf32, #tpu.memory_space<vmem>>, vector<2x256xf32>
    tpu.vector_store %arg8[%c0_56, %c256], %139 {strides = array<i32>} : memref<2x1024xf32, #tpu.memory_space<vmem>>, vector<2x256xf32>,
    %c2_57 = arith.constant 2 : index
    %c0_58 = arith.constant 0 : index
    %141 = memref.load %arg2[%c2_57, %c0_58] : memref<4x4xf32, #tpu.memory_space<smem>>
    %142 = vector.broadcast %141 : f32 to vector<2x256xf32>
    %143 = arith.mulf %1, %142 : vector<2x256xf32>
    %c2_59 = arith.constant 2 : index
    %c1_60 = arith.constant 1 : index
    %144 = memref.load %arg2[%c2_59, %c1_60] : memref<4x4xf32, #tpu.memory_space<smem>>
    %145 = vector.broadcast %144 : f32 to vector<2x256xf32>
    %146 = arith.mulf %2, %145 : vector<2x256xf32>
    %147 = arith.addf %143, %146 : vector<2x256xf32>
    %c2_61 = arith.constant 2 : index
    %c2_62 = arith.constant 2 : index
    %148 = memref.load %arg2[%c2_61, %c2_62] : memref<4x4xf32, #tpu.memory_space<smem>>
    %149 = vector.broadcast %148 : f32 to vector<2x256xf32>
    %150 = arith.mulf %3, %149 : vector<2x256xf32>
    %151 = arith.addf %147, %150 : vector<2x256xf32>
    %c2_63 = arith.constant 2 : index
    %c3_64 = arith.constant 3 : index
    %152 = memref.load %arg2[%c2_63, %c3_64] : memref<4x4xf32, #tpu.memory_space<smem>>
    %153 = vector.broadcast %152 : f32 to vector<2x256xf32>
    %154 = arith.mulf %4, %153 : vector<2x256xf32>
    %155 = arith.addf %151, %154 : vector<2x256xf32>
    %c2_65 = arith.constant 2 : index
    %156 = memref.load %arg3[%c2_65] : memref<4xf32, #tpu.memory_space<smem>>
    %157 = vector.broadcast %156 : f32 to vector<2x256xf32>
    %158 = arith.addf %155, %157 : vector<2x256xf32>
    %159 = vector.broadcast %83 : vector<2x1xf32> to vector<2x256xf32>
    %160 = arith.mulf %159, %158 : vector<2x256xf32>
    %161 = arith.addf %3, %160 : vector<2x256xf32>
    %c0_66 = arith.constant 0 : index
    %c512 = arith.constant 512 : index
    %162 = vector.load %arg8[%c0_66, %c512] : memref<2x1024xf32, #tpu.memory_space<vmem>>, vector<2x256xf32>
    tpu.vector_store %arg8[%c0_66, %c512], %161 {strides = array<i32>} : memref<2x1024xf32, #tpu.memory_space<vmem>>, vector<2x256xf32>,
    %c3_67 = arith.constant 3 : index
    %c0_68 = arith.constant 0 : index
    %163 = memref.load %arg2[%c3_67, %c0_68] : memref<4x4xf32, #tpu.memory_space<smem>>
    %164 = vector.broadcast %163 : f32 to vector<2x256xf32>
    %165 = arith.mulf %1, %164 : vector<2x256xf32>
    %c3_69 = arith.constant 3 : index
    %c1_70 = arith.constant 1 : index
    %166 = memref.load %arg2[%c3_69, %c1_70] : memref<4x4xf32, #tpu.memory_space<smem>>
    %167 = vector.broadcast %166 : f32 to vector<2x256xf32>
    %168 = arith.mulf %2, %167 : vector<2x256xf32>
    %169 = arith.addf %165, %168 : vector<2x256xf32>
    %c3_71 = arith.constant 3 : index
    %c2_72 = arith.constant 2 : index
    %170 = memref.load %arg2[%c3_71, %c2_72] : memref<4x4xf32, #tpu.memory_space<smem>>
    %171 = vector.broadcast %170 : f32 to vector<2x256xf32>
    %172 = arith.mulf %3, %171 : vector<2x256xf32>
    %173 = arith.addf %169, %172 : vector<2x256xf32>
    %c3_73 = arith.constant 3 : index
    %c3_74 = arith.constant 3 : index
    %174 = memref.load %arg2[%c3_73, %c3_74] : memref<4x4xf32, #tpu.memory_space<smem>>
    %175 = vector.broadcast %174 : f32 to vector<2x256xf32>
    %176 = arith.mulf %4, %175 : vector<2x256xf32>
    %177 = arith.addf %173, %176 : vector<2x256xf32>
    %c3_75 = arith.constant 3 : index
    %178 = memref.load %arg3[%c3_75] : memref<4xf32, #tpu.memory_space<smem>>
    %179 = vector.broadcast %178 : f32 to vector<2x256xf32>
    %180 = arith.addf %177, %179 : vector<2x256xf32>
    %181 = vector.broadcast %96 : vector<2x1xf32> to vector<2x256xf32>
    %182 = arith.mulf %181, %180 : vector<2x256xf32>
    %183 = arith.addf %4, %182 : vector<2x256xf32>
    %c0_76 = arith.constant 0 : index
    %c768 = arith.constant 768 : index
    %184 = vector.load %arg8[%c0_76, %c768] : memref<2x1024xf32, #tpu.memory_space<vmem>>, vector<2x256xf32>
    tpu.vector_store %arg8[%c0_76, %c768], %183 {strides = array<i32>} : memref<2x1024xf32, #tpu.memory_space<vmem>>, vector<2x256xf32>,
    return
  }
  func.func @transform_0(%arg0: i32) -> (i32, i32) {
    %c0_i32 = arith.constant 0 : i32
    %c0_i32_0 = arith.constant 0 : i32
    return %arg0, %c0_i32 : i32, i32
  }
  func.func @transform_1(%arg0: i32) -> (i32, i32) {
    %c0_i32 = arith.constant 0 : i32
    %c0_i32_0 = arith.constant 0 : i32
    %c0_i32_1 = arith.constant 0 : i32
    return %c0_i32, %c0_i32_0 : i32, i32
  }
  func.func @transform_2(%arg0: i32) -> i32 {
    %c0_i32 = arith.constant 0 : i32
    %c0_i32_0 = arith.constant 0 : i32
    return %c0_i32 : i32
  }
  func.func @transform_3(%arg0: i32) -> (i32, i32) {
    %c0_i32 = arith.constant 0 : i32
    %c0_i32_0 = arith.constant 0 : i32
    %c0_i32_1 = arith.constant 0 : i32
    return %c0_i32, %c0_i32_0 : i32, i32
  }
  func.func @transform_4(%arg0: i32) -> (i32, i32) {
    %c0_i32 = arith.constant 0 : i32
    %c0_i32_0 = arith.constant 0 : i32
    %c0_i32_1 = arith.constant 0 : i32
    return %c0_i32, %c0_i32_0 : i32, i32
  }
  func.func @transform_5(%arg0: i32) -> (i32, i32) {
    %c0_i32 = arith.constant 0 : i32
    %c0_i32_0 = arith.constant 0 : i32
    %c0_i32_1 = arith.constant 0 : i32
    return %c0_i32, %c0_i32_0 : i32, i32
  }
  func.func @transform_6(%arg0: i32) -> i32 {
    %c0_i32 = arith.constant 0 : i32
    %c0_i32_0 = arith.constant 0 : i32
    return %c0_i32 : i32
  }
  func.func @transform_7(%arg0: i32) -> (i32, i32) {
    %c0_i32 = arith.constant 0 : i32
    %c0_i32_0 = arith.constant 0 : i32
    return %arg0, %c0_i32 : i32, i32
  }
}

</mosaic_0001>

<llo_original>
// kernel: tpu_custom_call.1
$region0: #{tpu_custom_call.1}
  #allocation0 [shape = 'u32[]', space=smem, size = 0x4, offset = 0x4, fixed_abs, tag = 'smem constant byte address 0x4 - core index']
  #allocation1 [shape = 'u32[144,128]{1,0:T(1,128)}', space=vmem, size = 0x12000, scoped, tag = 'internal scratch']
  %s0 = inlined_call_operand.hbm [shape: f32[2,1024], index: 0, kind: input, shape index: {}]
  %s1 = inlined_call_operand.hbm [shape: f32[4,4], index: 1, kind: input, shape index: {}]
  %s2 = inlined_call_operand.hbm [shape: f32[4], index: 2, kind: input, shape index: {}]
  %s3 = inlined_call_operand.hbm [shape: f32[4,32], index: 3, kind: input, shape index: {}]
  %s4 = inlined_call_operand.hbm [shape: f32[1,32], index: 4, kind: input, shape index: {}]
  %s5 = inlined_call_operand.hbm [shape: f32[4,32], index: 5, kind: input, shape index: {}]
  %s6 = inlined_call_operand.hbm [shape: f32[4], index: 6, kind: input, shape index: {}]
  %s7 = inlined_call_operand.hbm [shape: f32[2,1024], index: 7, kind: output, shape index: {}]
  %s8 = sld [smem:[#allocation0]]
  $region66: #{tpu_custom_call.1} parent=0
    _
  %s10 = ssub.s32 1, %s8
  %s11 = scalar_select 0, %s10, %s8
  $region1: #{tpu_custom_call.1} parent=0
    #allocation2 [shape = 'u8[8192]{0}', space=vmem, size = 0x2000, scoped, tag = 'input window, operand 0, single buffered']
    #allocation3 [shape = 's32[1]{0}', space=sflag, size = 0x4, scoped, tag = 'scoped memory for tpu_custom_call.1']
    #allocation4 [shape = 's32[1]{0}', space=sflag, size = 0x4, scoped, tag = 'scoped memory for tpu_custom_call.1']
    #allocation5 [shape = 's32[1]{0}', space=sflag, size = 0x4, scoped, tag = 'scoped memory for tpu_custom_call.1']
    #allocation6 [shape = 'u8[2048]{0}', space=smem, size = 0x800, scoped, tag = 'input window, operand 1, single buffered']
    #allocation7 [shape = 'u8[512]{0}', space=smem, size = 0x200, scoped, tag = 'input window, operand 2, single buffered']
    #allocation8 [shape = 's32[1]{0}', space=sflag, size = 0x4, scoped, tag = 'scoped memory for tpu_custom_call.1']
    #allocation9 [shape = 'u8[2048]{0}', space=vmem, size = 0x800, scoped, tag = 'input window, operand 3, single buffered']
    #allocation10 [shape = 's32[1]{0}', space=sflag, size = 0x4, scoped, tag = 'scoped memory for tpu_custom_call.1']
    #allocation11 [shape = 'u8[512]{0}', space=vmem, size = 0x400, scoped, tag = 'input window, operand 4, single buffered']
    #allocation12 [shape = 'u8[2048]{0}', space=vmem, size = 0x800, scoped, tag = 'input window, operand 5, single buffered']
    #allocation13 [shape = 's32[1]{0}', space=sflag, size = 0x4, scoped, tag = 'scoped memory for tpu_custom_call.1']
    #allocation14 [shape = 'u8[512]{0}', space=smem, size = 0x200, scoped, tag = 'input window, operand 6, single buffered']
    #allocation15 [shape = 'u8[8192]{0}', space=vmem, size = 0x2000, scoped, tag = 'output window, operand 0, single buffered']
    %12 = vsyncpa [#allocation3], 0
    %13 = vsyncpa [#allocation5], 0
    %14 = vsyncpa [#allocation8], 0
    %15 = vsyncpa [#allocation10], 0
    %16 = vsyncpa [#allocation13], 0
    %17 = vsyncpa [#allocation4], 0
    // Predicated region
    $region2: #{tpu_custom_call.1} parent=1 // pred_check
      _
    $region3: #{tpu_custom_call.1} parent=1 // pred_check_branch
      %19 = sbr.rel (0) target = $region5
    $region4: #{tpu_custom_call.1} parent=1 // pred_region
      %s21 = ssub.s32 256, 256
      %22 = vsyncadd [#allocation3], %s21
      %s24 = sshll.u32 [#allocation2], 4
      %s25 = int_to_ptr.vmem [resolvable:$true] %s24
      %27 = dma.hbm_to_vmem [thread:$0]  %s0, 256, %s25, [#allocation3]
    $region5: #{tpu_custom_call.1} parent=1 // pred_fallthru
      _
    // Predicated region
    $region6: #{tpu_custom_call.1} parent=1 // pred_check
      _
    $region7: #{tpu_custom_call.1} parent=1 // pred_check_branch
      %29 = sbr.rel (0) target = $region9
    $region8: #{tpu_custom_call.1} parent=1 // pred_region
      %s31 = ssub.s32 64, 64
      %32 = vsyncadd [#allocation5], %s31
      %35 = dma.hbm_to_smem %s1, 64, [#allocation6], [#allocation5]
    $region9: #{tpu_custom_call.1} parent=1 // pred_fallthru
      _
    // Predicated region
    $region10: #{tpu_custom_call.1} parent=1 // pred_check
      _
    $region11: #{tpu_custom_call.1} parent=1 // pred_check_branch
      %37 = sbr.rel (0) target = $region13
    $region12: #{tpu_custom_call.1} parent=1 // pred_region
      %s39 = ssub.s32 16, 16
      %40 = vsyncadd [#allocation8], %s39
      %43 = dma.hbm_to_smem %s2, 16, [#allocation7], [#allocation8]
    $region13: #{tpu_custom_call.1} parent=1 // pred_fallthru
      _
    // Predicated region
    $region14: #{tpu_custom_call.1} parent=1 // pred_check
      _
    $region15: #{tpu_custom_call.1} parent=1 // pred_check_branch
      %45 = sbr.rel (0) target = $region17
    $region16: #{tpu_custom_call.1} parent=1 // pred_region
      %s47 = ssub.s32 64, 64
      %48 = vsyncadd [#allocation10], %s47
      %s50 = sshll.u32 [#allocation9], 4
      %s51 = int_to_ptr.vmem [resolvable:$true] %s50
      %53 = dma.hbm_to_vmem [thread:$0]  %s3, 64, %s51, [#allocation10]
    $region17: #{tpu_custom_call.1} parent=1 // pred_fallthru
      _
    // Predicated region
    $region18: #{tpu_custom_call.1} parent=1 // pred_check
      _
    $region19: #{tpu_custom_call.1} parent=1 // pred_check_branch
      %55 = sbr.rel (0) target = $region21
    $region20: #{tpu_custom_call.1} parent=1 // pred_region
      %s57 = ssub.s32 16, 16
      %58 = vsyncadd [#allocation10], %s57
      %s60 = sshll.u32 [#allocation11], 4
      %s61 = int_to_ptr.vmem [resolvable:$true] %s60
      %63 = dma.hbm_to_vmem [thread:$0]  %s4, 16, %s61, [#allocation10]
    $region21: #{tpu_custom_call.1} parent=1 // pred_fallthru
      _
    // Predicated region
    $region22: #{tpu_custom_call.1} parent=1 // pred_check
      _
    $region23: #{tpu_custom_call.1} parent=1 // pred_check_branch
      %65 = sbr.rel (0) target = $region25
    $region24: #{tpu_custom_call.1} parent=1 // pred_region
      %s67 = ssub.s32 64, 64
      %68 = vsyncadd [#allocation13], %s67
      %s70 = sshll.u32 [#allocation12], 4
      %s71 = int_to_ptr.vmem [resolvable:$true] %s70
      %73 = dma.hbm_to_vmem [thread:$0]  %s5, 64, %s71, [#allocation13]
    $region25: #{tpu_custom_call.1} parent=1 // pred_fallthru
      _
    // Predicated region
    $region26: #{tpu_custom_call.1} parent=1 // pred_check
      _
    $region27: #{tpu_custom_call.1} parent=1 // pred_check_branch
      %75 = sbr.rel (0) target = $region29
    $region28: #{tpu_custom_call.1} parent=1 // pred_region
      %s77 = ssub.s32 16, 16
      %78 = vsyncadd [#allocation8], %s77
      %81 = dma.hbm_to_smem %s6, 16, [#allocation14], [#allocation8]
    $region29: #{tpu_custom_call.1} parent=1 // pred_fallthru
      _
    // Predicated region
    $region30: #{tpu_custom_call.1} parent=1 // pred_check
      _
    $region31: #{tpu_custom_call.1} parent=1 // pred_check_branch
      %83 = sbr.rel (0) target = $region33
    $region32: #{tpu_custom_call.1} parent=1 // pred_region
      %84 = dma.done [#allocation3], 256
    $region33: #{tpu_custom_call.1} parent=1 // pred_fallthru
      _
    // Predicated region
    $region34: #{tpu_custom_call.1} parent=1 // pred_check
      _
    $region35: #{tpu_custom_call.1} parent=1 // pred_check_branch
      %86 = sbr.rel (0) target = $region37
    $region36: #{tpu_custom_call.1} parent=1 // pred_region
      %87 = dma.done [#allocation5], 64
    $region37: #{tpu_custom_call.1} parent=1 // pred_fallthru
      _
    // Predicated region
    $region38: #{tpu_custom_call.1} parent=1 // pred_check
      _
    $region39: #{tpu_custom_call.1} parent=1 // pred_check_branch
      %89 = sbr.rel (0) target = $region41
    $region40: #{tpu_custom_call.1} parent=1 // pred_region
      %90 = dma.done [#allocation8], 16
    $region41: #{tpu_custom_call.1} parent=1 // pred_fallthru
      _
    // Predicated region
    $region42: #{tpu_custom_call.1} parent=1 // pred_check
      _
    $region43: #{tpu_custom_call.1} parent=1 // pred_check_branch
      %92 = sbr.rel (0) target = $region45
    $region44: #{tpu_custom_call.1} parent=1 // pred_region
      %93 = dma.done [#allocation10], 64
    $region45: #{tpu_custom_call.1} parent=1 // pred_fallthru
      _
    // Predicated region
    $region46: #{tpu_custom_call.1} parent=1 // pred_check
      _
    $region47: #{tpu_custom_call.1} parent=1 // pred_check_branch
      %95 = sbr.rel (0) target = $region49
    $region48: #{tpu_custom_call.1} parent=1 // pred_region
      %96 = dma.done [#allocation10], 16
    $region49: #{tpu_custom_call.1} parent=1 // pred_fallthru
      _
    // Predicated region
    $region50: #{tpu_custom_call.1} parent=1 // pred_check
      _
    $region51: #{tpu_custom_call.1} parent=1 // pred_check_branch
      %98 = sbr.rel (0) target = $region53
    $region52: #{tpu_custom_call.1} parent=1 // pred_region
      %99 = dma.done [#allocation13], 64
    $region53: #{tpu_custom_call.1} parent=1 // pred_fallthru
      _
    // Predicated region
    $region54: #{tpu_custom_call.1} parent=1 // pred_check
      _
    $region55: #{tpu_custom_call.1} parent=1 // pred_check_branch
      %101 = sbr.rel (0) target = $region57
    $region56: #{tpu_custom_call.1} parent=1 // pred_region
      %102 = dma.done [#allocation8], 16
    $region57: #{tpu_custom_call.1} parent=1 // pred_fallthru
      _
    %103 = sfence
    %v104 = vld [vmem:[#allocation2] sm:$0xff]
    %v105 = vld [vmem:[#allocation2 + $0x8] sm:$0xff]
    %v108 = vunpack.c.l.s4 1983009808
    %v109 = vunpack.c.0.s8 %v108
    %v110 = vlaneseq
    %v111 = vshrl.u32 %v110, 7
    %v112 = vsub.s32 %v109, %v111
    %v113 = vrot.slane %v104, %v112
    %v114 = vcombine.high %v113, %v113
    %vm117 = vcmask 1041408
    %v118 = vsel %vm117, %v113, 0.0
    %v119 = vsel %vm117, %v114, 0.0
    %v120 = vadd.f32 %v118, %v119
    %121 = vadd.xlane.f32.xlu0 %v120
    %v122 = vpop.xlane.xlu0 %121
    %v123 = vmul.f32 %v122, 0.00390625
    %v124 = vcombine.high %v104, %v104
    %v126 = vunpack.c.l.s4 1983009808
    %v127 = vunpack.c.0.s8 %v126
    %v128 = vlaneseq
    %v129 = vshrl.u32 %v128, 7
    %v130 = vsub.s32 %v127, %v129
    %v131 = vrot.slane %v124, %v130
    %v132 = vcombine.high %v131, %v131
    %v135 = vsel %vm117, %v131, 0.0
    %v136 = vsel %vm117, %v132, 0.0
    %v137 = vadd.f32 %v135, %v136
    %138 = vadd.xlane.f32.xlu0 %v137
    %v139 = vpop.xlane.xlu0 %138
    %v140 = vmul.f32 %v139, 0.00390625
    %v143 = vunpack.c.l.s4 1983009808
    %v144 = vunpack.c.0.s8 %v143
    %v145 = vlaneseq
    %v146 = vshrl.u32 %v145, 7
    %v147 = vsub.s32 %v144, %v146
    %v148 = vrot.slane %v105, %v147
    %v149 = vcombine.high %v148, %v148
    %v152 = vsel %vm117, %v148, 0.0
    %v153 = vsel %vm117, %v149, 0.0
    %v154 = vadd.f32 %v152, %v153
    %155 = vadd.xlane.f32.xlu0 %v154
    %v156 = vpop.xlane.xlu0 %155
    %v157 = vmul.f32 %v156, 0.00390625
    %v158 = vcombine.high %v105, %v105
    %v160 = vunpack.c.l.s4 1983009808
    %v161 = vunpack.c.0.s8 %v160
    %v162 = vlaneseq
    %v163 = vshrl.u32 %v162, 7
    %v164 = vsub.s32 %v161, %v163
    %v165 = vrot.slane %v158, %v164
    %v166 = vcombine.high %v165, %v165
    %v169 = vsel %vm117, %v165, 0.0
    %v170 = vsel %vm117, %v166, 0.0
    %v171 = vadd.f32 %v169, %v170
    %172 = vadd.xlane.f32.xlu0 %v171
    %v173 = vpop.xlane.xlu0 %172
    %v174 = vmul.f32 %v173, 0.00390625
    %v175 = vld [vmem:[#allocation9] sm:$0x1]
    %v176 = vlaneseq
    %v177 = vshrl.u32 %v176, 7
    %v178 = vsub.s32 0, %v177
    %v179 = vrot.slane %v175, %v178
    %v180 = vmul.f32 %v123, %v179
    %v181 = vld [vmem:[#allocation9 + $0x1] sm:$0x1]
    %v182 = vlaneseq
    %v183 = vshrl.u32 %v182, 7
    %v184 = vsub.s32 0, %v183
    %v185 = vrot.slane %v181, %v184
    %v186 = vmul.f32 %v140, %v185
    %v187 = vadd.f32 %v180, %v186
    %v188 = vld [vmem:[#allocation9 + $0x2] sm:$0x1]
    %v189 = vlaneseq
    %v190 = vshrl.u32 %v189, 7
    %v191 = vsub.s32 0, %v190
    %v192 = vrot.slane %v188, %v191
    %v193 = vmul.f32 %v157, %v192
    %v194 = vadd.f32 %v187, %v193
    %v195 = vld [vmem:[#allocation9 + $0x3] sm:$0x1]
    %v196 = vlaneseq
    %v197 = vshrl.u32 %v196, 7
    %v198 = vsub.s32 0, %v197
    %v199 = vrot.slane %v195, %v198
    %v200 = vmul.f32 %v174, %v199
    %v201 = vadd.f32 %v194, %v200
    %v202 = vld [vmem:[#allocation11] sm:$0x1]
    %v204 = vlaneseq
    %v205 = vshrl.u32 %v204, 7
    %v206 = vsub.s32 0, %v205
    %v207 = vrot.slane %v202, %v206
    %v209 = vadd.f32 %v201, %v207
    %v210 = vmax.f32 %v209, 0.0
    %v211 = vld [vmem:[#allocation12] sm:$0x1]
    %v212 = vlaneseq
    %v213 = vshrl.u32 %v212, 7
    %v214 = vsub.s32 0, %v213
    %v215 = vrot.slane %v211, %v214
    %v216 = vmul.f32 %v210, %v215
    %vm217 = vcmask 254976
    %v218 = vsel %vm217, %v216, 0.0
    %219 = vadd.xlane.f32.xlu0 %v218
    %v220 = vpop.xlane.xlu0 %219
    %s221 = sld [smem:[#allocation14]]
    %v222 = vstv %s221
    %v223 = vadd.f32 %v220, %v222
    %v224 = vxor.u32 %v223, 2147483648
    %v225 = vmul.f32 %v224, 1.442695
    %v226 = vpow.pop %v225
    %v227 = vadd.f32 %v226, 1.0
    %v228 = vrcp.pop %v227
    %v229 = vmul.f32 1.0, %v228
    %v230 = vld [vmem:[#allocation12 + $0x1] sm:$0x1]
    %v231 = vlaneseq
    %v232 = vshrl.u32 %v231, 7
    %v233 = vsub.s32 0, %v232
    %v234 = vrot.slane %v230, %v233
    %v235 = vmul.f32 %v210, %v234
    %v236 = vsel %vm217, %v235, 0.0
    %237 = vadd.xlane.f32.xlu0 %v236
    %v238 = vpop.xlane.xlu0 %237
    %s239 = sld [smem:[#allocation14 + $0x1]]
    %v240 = vstv %s239
    %v241 = vadd.f32 %v238, %v240
    %v242 = vxor.u32 %v241, 2147483648
    %v243 = vmul.f32 %v242, 1.442695
    %v244 = vpow.pop %v243
    %v245 = vadd.f32 %v244, 1.0
    %v246 = vrcp.pop %v245
    %v247 = vmul.f32 1.0, %v246
    %v248 = vld [vmem:[#allocation12 + $0x2] sm:$0x1]
    %v249 = vlaneseq
    %v250 = vshrl.u32 %v249, 7
    %v251 = vsub.s32 0, %v250
    %v252 = vrot.slane %v248, %v251
    %v253 = vmul.f32 %v210, %v252
    %v254 = vsel %vm217, %v253, 0.0
    %255 = vadd.xlane.f32.xlu0 %v254
    %v256 = vpop.xlane.xlu0 %255
    %s257 = sld [smem:[#allocation14 + $0x2]]
    %v258 = vstv %s257
    %v259 = vadd.f32 %v256, %v258
    %v260 = vxor.u32 %v259, 2147483648
    %v261 = vmul.f32 %v260, 1.442695
    %v262 = vpow.pop %v261
    %v263 = vadd.f32 %v262, 1.0
    %v264 = vrcp.pop %v263
    %v265 = vmul.f32 1.0, %v264
    %v266 = vld [vmem:[#allocation12 + $0x3] sm:$0x1]
    %v267 = vlaneseq
    %v268 = vshrl.u32 %v267, 7
    %v269 = vsub.s32 0, %v268
    %v270 = vrot.slane %v266, %v269
    %v271 = vmul.f32 %v210, %v270
    %v272 = vsel %vm217, %v271, 0.0
    %273 = vadd.xlane.f32.xlu0 %v272
    %v274 = vpop.xlane.xlu0 %273
    %s275 = sld [smem:[#allocation14 + $0x3]]
    %v276 = vstv %s275
    %v277 = vadd.f32 %v274, %v276
    %v278 = vxor.u32 %v277, 2147483648
    %v279 = vmul.f32 %v278, 1.442695
    %v280 = vpow.pop %v279
    %v281 = vadd.f32 %v280, 1.0
    %v282 = vrcp.pop %v281
    %v283 = vmul.f32 1.0, %v282
    %s284 = sld [smem:[#allocation6]]
    %v285 = vstv %s284
    %v286 = vmul.f32 %v104, %v285
    %s287 = sld [smem:[#allocation6 + $0x1]]
    %v288 = vstv %s287
    %v289 = vrot.slane %v104, 4
    %v291 = vmul.f32 %v289, %v288
    %v292 = vadd.f32 %v286, %v291
    %s293 = sld [smem:[#allocation6 + $0x2]]
    %v294 = vstv %s293
    %v295 = vmul.f32 %v105, %v294
    %v296 = vadd.f32 %v292, %v295
    %s297 = sld [smem:[#allocation6 + $0x3]]
    %v298 = vstv %s297
    %v299 = vrot.slane %v105, 4
    %v301 = vmul.f32 %v299, %v298
    %v302 = vadd.f32 %v296, %v301
    %s303 = sld [smem:[#allocation7]]
    %v304 = vstv %s303
    %v305 = vadd.f32 %v302, %v304
    %v308 = vunpack.c.l.s4 1983009808
    %v309 = vunpack.c.0.s8 %v308
    %v310 = vlaneseq
    %v311 = vshrl.u32 %v310, 7
    %v312 = vsub.s32 %v309, %v311
    %v313 = vrot.slane %v305, %v312
    %v314 = vcombine.high %v313, %v313
    %v317 = vmul.f32 %v229, %v313
    %v318 = vmul.f32 %v229, %v314
    %v321 = vcombine.low %v317, %v318
    %v323 = vunpack.c.l.s4 1983009808
    %v324 = vunpack.c.0.s8 %v323
    %v325 = vlaneseq
    %v326 = vshrl.u32 %v325, 7
    %v327 = vsub.s32 %v324, %v326
    %v328 = vrot.slane %v321, %v327
    %v330 = vadd.f32 %v104, %v328
    %331 = vst [vmem:[#allocation15] sm:$0xf] %v330
    %s332 = sld [smem:[#allocation6 + $0x80]]
    %v333 = vstv %s332
    %v334 = vmul.f32 %v104, %v333
    %s335 = sld [smem:[#allocation6 + $0x81]]
    %v336 = vstv %s335
    %v337 = vmul.f32 %v289, %v336
    %v338 = vadd.f32 %v334, %v337
    %s339 = sld [smem:[#allocation6 + $0x82]]
    %v340 = vstv %s339
    %v341 = vmul.f32 %v105, %v340
    %v342 = vadd.f32 %v338, %v341
    %s343 = sld [smem:[#allocation6 + $0x83]]
    %v344 = vstv %s343
    %v345 = vmul.f32 %v299, %v344
    %v346 = vadd.f32 %v342, %v345
    %s347 = sld [smem:[#allocation7 + $0x1]]
    %v348 = vstv %s347
    %v349 = vadd.f32 %v346, %v348
    %v352 = vunpack.c.l.s4 1983009808
    %v353 = vunpack.c.0.s8 %v352
    %v354 = vlaneseq
    %v355 = vshrl.u32 %v354, 7
    %v356 = vsub.s32 %v353, %v355
    %v357 = vrot.slane %v349, %v356
    %v358 = vcombine.high %v357, %v357
    %v361 = vmul.f32 %v247, %v357
    %v362 = vmul.f32 %v247, %v358
    %v365 = vcombine.low %v361, %v362
    %v367 = vunpack.c.l.s4 1983009808
    %v368 = vunpack.c.0.s8 %v367
    %v369 = vlaneseq
    %v370 = vshrl.u32 %v369, 7
    %v371 = vsub.s32 %v368, %v370
    %v372 = vrot.slane %v365, %v371
    %v374 = vadd.f32 %v289, %v372
    %375 = vst [vmem:[#allocation15 + $0x4] sm:$0xf] %v374
    %s376 = sld [smem:[#allocation6 + $0x100]]
    %v377 = vstv %s376
    %v378 = vmul.f32 %v104, %v377
    %s379 = sld [smem:[#allocation6 + $0x101]]
    %v380 = vstv %s379
    %v381 = vmul.f32 %v289, %v380
    %v382 = vadd.f32 %v378, %v381
    %s383 = sld [smem:[#allocation6 + $0x102]]
    %v384 = vstv %s383
    %v385 = vmul.f32 %v105, %v384
    %v386 = vadd.f32 %v382, %v385
    %s387 = sld [smem:[#allocation6 + $0x103]]
    %v388 = vstv %s387
    %v389 = vmul.f32 %v299, %v388
    %v390 = vadd.f32 %v386, %v389
    %s391 = sld [smem:[#allocation7 + $0x2]]
    %v392 = vstv %s391
    %v393 = vadd.f32 %v390, %v392
    %v396 = vunpack.c.l.s4 1983009808
    %v397 = vunpack.c.0.s8 %v396
    %v398 = vlaneseq
    %v399 = vshrl.u32 %v398, 7
    %v400 = vsub.s32 %v397, %v399
    %v401 = vrot.slane %v393, %v400
    %v402 = vcombine.high %v401, %v401
    %v405 = vmul.f32 %v265, %v401
    %v406 = vmul.f32 %v265, %v402
    %v409 = vcombine.low %v405, %v406
    %v411 = vunpack.c.l.s4 1983009808
    %v412 = vunpack.c.0.s8 %v411
    %v413 = vlaneseq
    %v414 = vshrl.u32 %v413, 7
    %v415 = vsub.s32 %v412, %v414
    %v416 = vrot.slane %v409, %v415
    %v418 = vadd.f32 %v105, %v416
    %419 = vst [vmem:[#allocation15 + $0x8] sm:$0xf] %v418
    %s420 = sld [smem:[#allocation6 + $0x180]]
    %v421 = vstv %s420
    %v422 = vmul.f32 %v104, %v421
    %s423 = sld [smem:[#allocation6 + $0x181]]
    %v424 = vstv %s423
    %v425 = vmul.f32 %v289, %v424
    %v426 = vadd.f32 %v422, %v425
    %s427 = sld [smem:[#allocation6 + $0x182]]
    %v428 = vstv %s427
    %v429 = vmul.f32 %v105, %v428
    %v430 = vadd.f32 %v426, %v429
    %s431 = sld [smem:[#allocation6 + $0x183]]
    %v432 = vstv %s431
    %v433 = vmul.f32 %v299, %v432
    %v434 = vadd.f32 %v430, %v433
    %s435 = sld [smem:[#allocation7 + $0x3]]
    %v436 = vstv %s435
    %v437 = vadd.f32 %v434, %v436
    %v440 = vunpack.c.l.s4 1983009808
    %v441 = vunpack.c.0.s8 %v440
    %v442 = vlaneseq
    %v443 = vshrl.u32 %v442, 7
    %v444 = vsub.s32 %v441, %v443
    %v445 = vrot.slane %v437, %v444
    %v446 = vcombine.high %v445, %v445
    %v449 = vmul.f32 %v283, %v445
    %v450 = vmul.f32 %v283, %v446
    %v453 = vcombine.low %v449, %v450
    %v455 = vunpack.c.l.s4 1983009808
    %v456 = vunpack.c.0.s8 %v455
    %v457 = vlaneseq
    %v458 = vshrl.u32 %v457, 7
    %v459 = vsub.s32 %v456, %v458
    %v460 = vrot.slane %v453, %v459
    %v462 = vadd.f32 %v299, %v460
    %463 = vst [vmem:[#allocation15 + $0xc] sm:$0xf] %v462
    // Predicated region
    $region58: #{tpu_custom_call.1} parent=1 // pred_check
      _
    $region59: #{tpu_custom_call.1} parent=1 // pred_check_branch
      %465 = sbr.rel (0) target = $region61
    $region60: #{tpu_custom_call.1} parent=1 // pred_region
      %s467 = ssub.s32 256, 256
      %468 = vsyncadd [#allocation4], %s467
      %s470 = sshll.u32 [#allocation15], 4
      %s471 = int_to_ptr.vmem [resolvable:$true] %s470
      %473 = dma.vmem_to_hbm [thread:$0]  %s471, 256, %s7, [#allocation4]
    $region61: #{tpu_custom_call.1} parent=1 // pred_fallthru
      _
    // Predicated region
    $region62: #{tpu_custom_call.1} parent=1 // pred_check
      _
    $region63: #{tpu_custom_call.1} parent=1 // pred_check_branch
      %475 = sbr.rel (0) target = $region65
    $region64: #{tpu_custom_call.1} parent=1 // pred_region
      %476 = dma.done [#allocation4], 256
    $region65: #{tpu_custom_call.1} parent=1 // pred_fallthru
      _
    %477 = vsyncpa [#allocation3], 1
    %478 = vsyncpa [#allocation10], 1
    %479 = vsyncpa [#allocation13], 1
    %480 = vsyncpa [#allocation4], 1
    %481 = vsyncpa [#allocation5], 1
    %482 = vsyncpa [#allocation8], 1

</llo_original>
